<compile_context>
chip_gen: v7x
topology: tpu7x:2x2x1
jax: 0.10.0
libtpu: 0.0.40
codegen_flags: <defaults>
</compile_context>

<pallas_src>
import jax
import jax.numpy as jnp
from jax.experimental import pallas as pl
from jax.experimental.pallas import tpu as pltpu


def _gaussian1d_kernel(x_ref, scale_ref, o_ref):
    # x_ref:     (Bt, F)  current batch tile (lane-dense, F == full last dim)
    # scale_ref: (1,  F)  resident folded parameters: W + exp(b)
    # out = scale * x - 1
    o_ref[...] = x_ref[...] * scale_ref[...] - 1.0


def _choose_batch_tile(batch, row_bytes, target_bytes=2 << 20):
    """Pick a batch tile: ~target_bytes per input block, sublane-friendly."""
    bt = max(1, target_bytes // max(row_bytes, 1))
    if bt >= batch:
        # Whole array in one block; block dim == full array dim is always legal.
        return batch
    # Multiple of 8 keeps the sublane dimension cleanly tiled.
    bt = max(8, (bt // 8) * 8)
    return min(bt, batch)


def gaussian_transform_1d(x, weight, bias):
    """x: (B, S1, S2); weight: (S1, S2); bias: (S2,)."""
    B, S1, S2 = x.shape
    assert weight.shape == (S1, S2)
    assert bias.shape == (S2,)

    # Fold exp(bias) into the weight once (tiny parameter-side op):
    #   W*x + exp(b)*x - 1 == (W + exp(b)) * x - 1
    scale = (weight.astype(jnp.float32) + jnp.exp(bias.astype(jnp.float32))[None, :]
             ).astype(x.dtype)

    # Lane-dense 2-D layout: last dim F = S1*S2 (1024 for S=32).
    F = S1 * S2
    x2d = x.reshape(B, F)           # contiguous view, no copy
    scale2d = scale.reshape(1, F)

    row_bytes = F * x.dtype.itemsize
    Bt = _choose_batch_tile(B, row_bytes)
    grid = (pl.cdiv(B, Bt),)

    out2d = pl.pallas_call(
        _gaussian1d_kernel,
        out_shape=jax.ShapeDtypeStruct((B, F), x.dtype),
        grid_spec=pltpu.PrefetchScalarGridSpec(
            num_scalar_prefetch=0,
            grid=grid,
            in_specs=[
                pl.BlockSpec((Bt, F), lambda i: (i, 0)),   # x     (per-tile)
                pl.BlockSpec((1, F), lambda i: (0, 0)),    # scale (resident)
            ],
            out_specs=pl.BlockSpec((Bt, F), lambda i: (i, 0)),
        ),
        compiler_params=pltpu.CompilerParams(
            dimension_semantics=("parallel",),
        ),
    )(x2d, scale2d)

    return out2d.reshape(B, S1, S2)


def gaussian_transform_1d_ref(x, weight, bias):
    # Exact PyTorch operation order for comparison.
    z = weight * x
    x2 = jnp.exp(bias) * x
    return z + (x2 - 1.0)


if __name__ == "__main__":
    # Small shapes consistent with the module: scale = 32, batch = 2.
    S = 32
    B = 2

    key = jax.random.PRNGKey(0)
    kx, kw, kb = jax.random.split(key, 3)

    # nn.Linear(S, S) parameter shapes: weight (S, S), bias (S,)
    weight = jax.random.uniform(kw, (S, S), jnp.float32, minval=-0.1, maxval=0.1)
    bias = jax.random.uniform(kb, (S,), jnp.float32, minval=-0.1, maxval=0.1)
    x = jax.random.normal(kx, (B, S, S), jnp.float32)

    out = gaussian_transform_1d(x, weight, bias)
    out = jax.block_until_ready(out)

    ref = gaussian_transform_1d_ref(x, weight, bias)
    assert out.shape == (B, S, S)
    assert jnp.allclose(out, ref, atol=1e-5, rtol=1e-5)

    print("KERNEL_OK")
</pallas_src>

<mosaic_0001>
module attributes {stable_mosaic.version = 11 : i64} {
  func.func @_gaussian1d_kernel(%arg0: i32, %arg1: memref<2x1024xf32, #tpu.memory_space<vmem>>, %arg2: memref<1x1024xf32, #tpu.memory_space<vmem>>, %arg3: memref<2x1024xf32, #tpu.memory_space<vmem>>) attributes {dimension_semantics = [#tpu.dimension_semantics<parallel>], iteration_bounds = array<i64: 1>, scalar_prefetch = 0 : i64, scratch_operands = 0 : i64, tpu.core_type = #tpu.core_type<tc>, window_params = [{transform_indices = @transform_0, window_bounds = array<i64: 2, 1024>}, {pipeline_mode = #tpu.pipeline_mode<synchronous>, transform_indices = @transform_1, window_bounds = array<i64: 1, 1024>}, {transform_indices = @transform_2, window_bounds = array<i64: 2, 1024>}]} {
    %c0 = arith.constant 0 : index
    %c0_0 = arith.constant 0 : index
    %0 = vector.load %arg1[%c0, %c0_0] : memref<2x1024xf32, #tpu.memory_space<vmem>>, vector<2x1024xf32>
    %c0_1 = arith.constant 0 : index
    %c0_2 = arith.constant 0 : index
    %1 = vector.load %arg2[%c0_1, %c0_2] : memref<1x1024xf32, #tpu.memory_space<vmem>>, vector<1x1024xf32>
    %2 = vector.broadcast %1 : vector<1x1024xf32> to vector<2x1024xf32>
    %3 = arith.mulf %0, %2 : vector<2x1024xf32>
    %cst = arith.constant 1.000000e+00 : f32
    %4 = vector.broadcast %cst : f32 to vector<2x1024xf32>
    %5 = arith.subf %3, %4 : vector<2x1024xf32>
    %c0_3 = arith.constant 0 : index
    %c0_4 = arith.constant 0 : index
    %6 = vector.load %arg3[%c0_3, %c0_4] : memref<2x1024xf32, #tpu.memory_space<vmem>>, vector<2x1024xf32>
    tpu.vector_store %arg3[%c0_3, %c0_4], %5 {strides = array<i32>} : memref<2x1024xf32, #tpu.memory_space<vmem>>, vector<2x1024xf32>,
    return
  }
  func.func @transform_0(%arg0: i32) -> (i32, i32) {
    %c0_i32 = arith.constant 0 : i32
    %c0_i32_0 = arith.constant 0 : i32
    return %arg0, %c0_i32 : i32, i32
  }
  func.func @transform_1(%arg0: i32) -> (i32, i32) {
    %c0_i32 = arith.constant 0 : i32
    %c0_i32_0 = arith.constant 0 : i32
    %c0_i32_1 = arith.constant 0 : i32
    return %c0_i32, %c0_i32_0 : i32, i32
  }
  func.func @transform_2(%arg0: i32) -> (i32, i32) {
    %c0_i32 = arith.constant 0 : i32
    %c0_i32_0 = arith.constant 0 : i32
    return %arg0, %c0_i32 : i32, i32
  }
}

</mosaic_0001>

<llo_original>
// kernel: tpu_custom_call.1
$region0: #{tpu_custom_call.1}
  #allocation0 [shape = 'u32[]', space=smem, size = 0x4, offset = 0x4, fixed_abs, tag = 'smem constant byte address 0x4 - core index']
  #allocation1 [shape = 'u32[144,128]{1,0:T(1,128)}', space=vmem, size = 0x12000, scoped, tag = 'internal scratch']
  %s0 = inlined_call_operand.hbm [shape: f32[2,1024], index: 0, kind: input, shape index: {}]
  %s1 = inlined_call_operand.hbm [shape: f32[1,1024], index: 1, kind: input, shape index: {}]
  %s2 = inlined_call_operand.hbm [shape: f32[2,1024], index: 2, kind: output, shape index: {}]
  %s3 = sld [smem:[#allocation0]]
  $region26: #{tpu_custom_call.1} parent=0
    _
  %s5 = ssub.s32 1, %s3
  %s6 = scalar_select 0, %s5, %s3
  $region1: #{tpu_custom_call.1} parent=0
    #allocation2 [shape = 'u8[8192]{0}', space=vmem, size = 0x2000, scoped, tag = 'input window, operand 0, single buffered']
    #allocation3 [shape = 's32[1]{0}', space=sflag, size = 0x4, scoped, tag = 'scoped memory for tpu_custom_call.1']
    #allocation4 [shape = 's32[1]{0}', space=sflag, size = 0x4, scoped, tag = 'scoped memory for tpu_custom_call.1']
    #allocation5 [shape = 'u8[4096]{0}', space=vmem, size = 0x1000, scoped, tag = 'input window, operand 1, single buffered']
    #allocation6 [shape = 's32[1]{0}', space=sflag, size = 0x4, scoped, tag = 'scoped memory for tpu_custom_call.1']
    #allocation7 [shape = 'u8[8192]{0}', space=vmem, size = 0x2000, scoped, tag = 'output window, operand 0, single buffered']
    %7 = vsyncpa [#allocation3], 0
    %8 = vsyncpa [#allocation6], 0
    %9 = vsyncpa [#allocation4], 0
    // Predicated region
    $region2: #{tpu_custom_call.1} parent=1 // pred_check
      _
    $region3: #{tpu_custom_call.1} parent=1 // pred_check_branch
      %11 = sbr.rel (0) target = $region5
    $region4: #{tpu_custom_call.1} parent=1 // pred_region
      %s13 = ssub.s32 256, 256
      %14 = vsyncadd [#allocation3], %s13
      %s16 = sshll.u32 [#allocation2], 4
      %s17 = int_to_ptr.vmem [resolvable:$true] %s16
      %19 = dma.hbm_to_vmem [thread:$0]  %s0, 256, %s17, [#allocation3]
    $region5: #{tpu_custom_call.1} parent=1 // pred_fallthru
      _
    // Predicated region
    $region6: #{tpu_custom_call.1} parent=1 // pred_check
      _
    $region7: #{tpu_custom_call.1} parent=1 // pred_check_branch
      %21 = sbr.rel (0) target = $region9
    $region8: #{tpu_custom_call.1} parent=1 // pred_region
      %s23 = ssub.s32 128, 128
      %24 = vsyncadd [#allocation6], %s23
      %s26 = sshll.u32 [#allocation5], 4
      %s27 = int_to_ptr.vmem [resolvable:$true] %s26
      %29 = dma.hbm_to_vmem [thread:$0]  %s1, 128, %s27, [#allocation6]
    $region9: #{tpu_custom_call.1} parent=1 // pred_fallthru
      _
    // Predicated region
    $region10: #{tpu_custom_call.1} parent=1 // pred_check
      _
    $region11: #{tpu_custom_call.1} parent=1 // pred_check_branch
      %31 = sbr.rel (0) target = $region13
    $region12: #{tpu_custom_call.1} parent=1 // pred_region
      %32 = dma.done [#allocation3], 256
    $region13: #{tpu_custom_call.1} parent=1 // pred_fallthru
      _
    // Predicated region
    $region14: #{tpu_custom_call.1} parent=1 // pred_check
      _
    $region15: #{tpu_custom_call.1} parent=1 // pred_check_branch
      %34 = sbr.rel (0) target = $region17
    $region16: #{tpu_custom_call.1} parent=1 // pred_region
      %35 = dma.done [#allocation6], 128
    $region17: #{tpu_custom_call.1} parent=1 // pred_fallthru
      _
    %v36 = vld [vmem:[#allocation2] sm:$0xff]
    %v37 = vld [vmem:[#allocation2 + $0x8] sm:$0xff]
    %v38 = vld [vmem:[#allocation5] sm:$0xff]
    %v40 = vlaneseq
    %v41 = vshrl.u32 %v40, 7
    %v42 = vsub.s32 0, %v41
    %v43 = vrot.slane %v38, %v42
    %v44 = vlaneseq
    %v45 = vshrl.u32 %v44, 7
    %v46 = vsub.s32 1, %v45
    %v47 = vrot.slane %v38, %v46
    %v48 = vlaneseq
    %v49 = vshrl.u32 %v48, 7
    %v50 = vsub.s32 2, %v49
    %v51 = vrot.slane %v38, %v50
    %v52 = vlaneseq
    %v53 = vshrl.u32 %v52, 7
    %v54 = vsub.s32 3, %v53
    %v55 = vrot.slane %v38, %v54
    %v56 = vlaneseq
    %v57 = vshrl.u32 %v56, 7
    %v58 = vsub.s32 4, %v57
    %v59 = vrot.slane %v38, %v58
    %v60 = vlaneseq
    %v61 = vshrl.u32 %v60, 7
    %v62 = vsub.s32 5, %v61
    %v63 = vrot.slane %v38, %v62
    %v64 = vlaneseq
    %v65 = vshrl.u32 %v64, 7
    %v66 = vsub.s32 6, %v65
    %v67 = vrot.slane %v38, %v66
    %v68 = vlaneseq
    %v69 = vshrl.u32 %v68, 7
    %v70 = vsub.s32 7, %v69
    %v71 = vrot.slane %v38, %v70
    %v72 = vcombine.low %v43, %v47
    %v73 = vcombine.low %v51, %v55
    %v75 = vunpack.c.l.s4 1983009808
    %v76 = vunpack.c.0.s8 %v75
    %v77 = vlaneseq
    %v78 = vshrl.u32 %v77, 7
    %v79 = vsub.s32 %v76, %v78
    %v80 = vrot.slane %v72, %v79
    %v82 = vunpack.c.l.s4 1983009808
    %v83 = vunpack.c.0.s8 %v82
    %v84 = vlaneseq
    %v85 = vshrl.u32 %v84, 7
    %v86 = vsub.s32 %v83, %v85
    %v87 = vrot.slane %v73, %v86
    %v88 = vcombine.low %v80, %v87
    %v89 = vcombine.low %v59, %v63
    %v90 = vcombine.low %v67, %v71
    %v92 = vunpack.c.l.s4 1983009808
    %v93 = vunpack.c.0.s8 %v92
    %v94 = vlaneseq
    %v95 = vshrl.u32 %v94, 7
    %v96 = vsub.s32 %v93, %v95
    %v97 = vrot.slane %v89, %v96
    %v99 = vunpack.c.l.s4 1983009808
    %v100 = vunpack.c.0.s8 %v99
    %v101 = vlaneseq
    %v102 = vshrl.u32 %v101, 7
    %v103 = vsub.s32 %v100, %v102
    %v104 = vrot.slane %v90, %v103
    %v105 = vcombine.low %v97, %v104
    %v108 = vmul.f32 %v36, %v88
    %v109 = vmul.f32 %v37, %v105
    %v110 = vsub.f32 %v108, 1.0
    %v111 = vsub.f32 %v109, 1.0
    %112 = vst [vmem:[#allocation7] sm:$0xff] %v110
    %113 = vst [vmem:[#allocation7 + $0x8] sm:$0xff] %v111
    // Predicated region
    $region18: #{tpu_custom_call.1} parent=1 // pred_check
      _
    $region19: #{tpu_custom_call.1} parent=1 // pred_check_branch
      %115 = sbr.rel (0) target = $region21
    $region20: #{tpu_custom_call.1} parent=1 // pred_region
      %s117 = ssub.s32 256, 256
      %118 = vsyncadd [#allocation4], %s117
      %s120 = sshll.u32 [#allocation7], 4
      %s121 = int_to_ptr.vmem [resolvable:$true] %s120
      %123 = dma.vmem_to_hbm [thread:$0]  %s121, 256, %s2, [#allocation4]
    $region21: #{tpu_custom_call.1} parent=1 // pred_fallthru
      _
    // Predicated region
    $region22: #{tpu_custom_call.1} parent=1 // pred_check
      _
    $region23: #{tpu_custom_call.1} parent=1 // pred_check_branch
      %125 = sbr.rel (0) target = $region25
    $region24: #{tpu_custom_call.1} parent=1 // pred_region
      %126 = dma.done [#allocation4], 256
    $region25: #{tpu_custom_call.1} parent=1 // pred_fallthru
      _
    %127 = vsyncpa [#allocation3], 1
    %128 = vsyncpa [#allocation6], 1
    %129 = vsyncpa [#allocation4], 1

</llo_original>
